<compile_context>
chip_gen: v5e
topology: v5e:2x2
jax: 0.10.0
libtpu: 0.0.40
codegen_flags: <defaults>
</compile_context>

<pallas_src>
import functools

import jax
import jax.numpy as jnp
import numpy as np
from jax.experimental import pallas as pl
from jax.experimental.pallas import tpu as pltpu

C = 16      # intermedeate_layer_dimension
EPS = 1e-5  # nn.BatchNorm1d default eps


def _round_up(x, m):
    return ((x + m - 1) // m) * m


def _level_kernel(x_ref, wmat_ref, vec_ref, last_ref, out_ref, *, M):
    """One grid step == one group of `gsize` orientations of one level.

    x_ref    : (1, gsize, Mp)  channel-major signals, lane-padded (M = N*L)
    wmat_ref : (1, 2, H, H)    block-diagonal hidden Conv1d weights (layers 2, 3)
    vec_ref  : (1, H, DV)      cols [0:gsize]=W1 (block-structured), then
                               b1, g2, be2, g3, be3 (one column each)
    last_ref : (1, gsize, DL)  cols [0:H]=last-layer weight, col [H]=last bias
    out_ref  : (1, gsize, Mp)
    """
    H = wmat_ref.shape[-1]
    gsize = x_ref.shape[1]
    Mp = x_ref.shape[-1]

    x = x_ref[0]                       # (gsize, Mp)
    vec = vec_ref[0]                   # (H, DV)
    lst = last_ref[0]                  # (gsize, DL)

    W1 = vec[:, :gsize]                # (H, gsize)
    b1 = vec[:, gsize:gsize + 1]       # (H, 1)
    g2 = vec[:, gsize + 1:gsize + 2]
    be2 = vec[:, gsize + 2:gsize + 3]
    g3 = vec[:, gsize + 3:gsize + 4]
    be3 = vec[:, gsize + 4:gsize + 5]
    Wl = lst[:, :H]                    # (gsize, H)
    bl = lst[:, H:H + 1]               # (gsize, 1)

    inv_m = jnp.float32(1.0 / M)

    # Lane-validity mask generated in-kernel (M is a closure constant); only
    # materialized when the lane axis is actually padded.
    if Mp > M:
        lane = jax.lax.broadcasted_iota(jnp.int32, (1, Mp), 1)
        valid = (lane < M).astype(jnp.float32)          # (1, Mp)
    else:
        valid = None

    # first_layer (Conv1d 1->16, k=1) as block matmul + ReLU
    h = jnp.maximum(jnp.dot(W1, x, preferred_element_type=jnp.float32) + b1, 0.0)

    def hidden(h, W, g, be):
        # hidden Conv1d(16->16, k=1); bias omitted (exactly cancelled by
        # training-mode BatchNorm mean subtraction).
        if valid is not None:
            h = h * valid   # zero padded lanes -> padded columns of z are exactly 0
        z = jnp.dot(W, h, preferred_element_type=jnp.float32)      # (H, Mp)
        # One-pass BN stats as lane-axis sums (VPU + XLU; MXU slot stays free).
        s1 = jnp.sum(z, axis=-1, keepdims=True)                    # (H, 1)
        s2 = jnp.sum(z * z, axis=-1, keepdims=True)                # (H, 1)
        mu = s1 * inv_m
        var = jnp.maximum(s2 * inv_m - mu * mu, 0.0)               # f32 insurance
        s = g * jax.lax.rsqrt(var + EPS)   # normalize + affine folded to scale/shift
        t = be - mu * s
        return jnp.maximum(z * s + t, 0.0)

    h = hidden(h, wmat_ref[0, 0], g2, be2)
    h = hidden(h, wmat_ref[0, 1], g3, be3)

    # last_layer (Conv1d 16->1, k=1); padded lanes hold garbage, sliced off host-side.
    out_ref[0] = jnp.dot(Wl, h, preferred_element_type=jnp.float32) + bl


def _default_group_count(O):
    """One grid step per TensorCore: G=1 on single-TC chips (v5e/v6e), G=2 when
    the device exposes >= 2 cores so the 'parallel' grid axis shards."""
    try:
        n_tc = int(getattr(jax.devices()[0], "num_cores", 1))
    except Exception:
        n_tc = 1
    return 2 if (n_tc >= 2 and O >= 2 and O % 2 == 0) else 1


def _vmem_limit_bytes(gsize, H, Mp, DV, DL):
    """Scoped-VMEM limit derived from the real residents, capped by the chip."""
    blocks = 2 * (2 * gsize * Mp + 2 * H * H + H * DV + gsize * DL)  # dbl-buffered
    temps = 5 * H * Mp                               # live (H, Mp) f32 temporaries
    needed = 4 * (blocks + temps) + (1 << 20)
    try:
        cap = int(0.75 * pltpu.get_tpu_info().vmem_capacity_bytes)
    except Exception:
        cap = 48 * 1024 * 1024      # safe even on v7x's 64 MiB physical VMEM
    return int(min(max(needed, 32 * 1024 * 1024), cap))


def run_level(x_nol, p, *, G=None):
    """Apply the per-orient denoising MLPs of one level. x_nol: (N, O, L) f32."""
    N, O, L = x_nol.shape
    M = N * L
    Mp = max(128, _round_up(M, 128))
    if G is None:
        G = _default_group_count(O)
    gsize = O // G
    H = gsize * C
    f32 = jnp.float32

    # ---------- host-side parameter packing (3 slabs instead of 13 arrays) ----------
    eye = jnp.eye(gsize, dtype=f32)

    w1 = p["w1"].astype(f32).reshape(G, gsize, C)
    W1g = jnp.einsum('gic,ij->gicj', w1, eye).reshape(G, H, gsize)

    def col(v):  # (O, C, 1) -> (G, H, 1)
        return v.astype(f32).reshape(G, H, 1)

    DV = max(128, _round_up(gsize + 5, 128))
    vecs = jnp.concatenate([W1g, col(p["b1"]), col(p["g2"]), col(p["be2"]),
                            col(p["g3"]), col(p["be3"])], axis=2)
    vecs = jnp.pad(vecs, ((0, 0), (0, 0), (0, DV - vecs.shape[2])))

    def bdiag(W):  # (O, C, C) -> (G, H, H) block-diagonal per group
        Wg = W.astype(f32).reshape(G, gsize, C, C)
        return jnp.einsum('gicd,ij->gicjd', Wg, eye).reshape(G, H, H)

    wmats = jnp.stack([bdiag(p["W2"]), bdiag(p["W3"])], axis=1)     # (G, 2, H, H)

    wl = p["wl"].astype(f32).reshape(G, gsize, C)
    Wlg = jnp.einsum('gic,ij->gijc', wl, eye).reshape(G, gsize, H)
    DL = max(128, _round_up(H + 1, 128))
    lasts = jnp.concatenate([Wlg, p["bl"].astype(f32).reshape(G, gsize, 1)], axis=2)
    lasts = jnp.pad(lasts, ((0, 0), (0, 0), (0, DL - lasts.shape[2])))

    # ---------- inputs: (N, O, L) -> (G, gsize, Mp) channel-major, lane-padded ----------
    # TODO(synk): accept/produce a channel-major (O, N*L) layout upstream so the
    # transpose round-trips over HBM disappear for large levels.
    x = jnp.transpose(x_nol.astype(f32), (1, 0, 2)).reshape(G, gsize, M)
    if Mp > M:
        x = jnp.pad(x, ((0, 0), (0, 0), (0, Mp - M)))

    kern = functools.partial(_level_kernel, M=M)
    out = pl.pallas_call(
        kern,
        out_shape=jax.ShapeDtypeStruct((G, gsize, Mp), f32),
        grid_spec=pltpu.PrefetchScalarGridSpec(
            num_scalar_prefetch=0,
            grid=(G,),
            in_specs=[pl.BlockSpec((1, gsize, Mp), lambda g: (g, 0, 0)),
                      pl.BlockSpec((1, 2, H, H), lambda g: (g, 0, 0, 0)),
                      pl.BlockSpec((1, H, DV), lambda g: (g, 0, 0)),
                      pl.BlockSpec((1, gsize, DL), lambda g: (g, 0, 0))],
            out_specs=pl.BlockSpec((1, gsize, Mp), lambda g: (g, 0, 0))),
        compiler_params=pltpu.CompilerParams(
            dimension_semantics=("parallel",),
            vmem_limit_bytes=_vmem_limit_bytes(gsize, H, Mp, DV, DL)),
    )(x, wmats, vecs, lasts)

    # (G, gsize, Mp) -> (O, M) -> (N, O, L)
    out = out.reshape(O, Mp)[:, :M].reshape(O, N, L)
    return jnp.transpose(out, (1, 0, 2))


def denoising_nn_forward(input_list, level_params):
    """Mirror of denoising_neural_network.forward."""
    max_level = len(level_params)
    assert len(input_list) == max_level + 1
    output_list = [None] * (max_level + 1)
    for level in range(1, max_level + 1):
        output_list[level] = run_level(input_list[level], level_params[level - 1])
    output_list[0] = output_list[1][:, :1]
    return output_list


def init_level_params(key, O):
    """Deterministic synthetic parameters for all `O` orient-MLPs of one level."""
    ks = jax.random.split(key, 12)
    u = lambda k, shape, s: jax.random.uniform(k, shape, jnp.float32, -1.0, 1.0) * s
    return dict(
        w1=u(ks[0], (O, C, 1), 1.0),   b1=u(ks[1], (O, C, 1), 0.5),
        W2=u(ks[2], (O, C, C), 0.25),  b2=u(ks[3], (O, C, 1), 0.5),
        g2=1.0 + u(ks[4], (O, C, 1), 0.1), be2=u(ks[5], (O, C, 1), 0.1),
        W3=u(ks[6], (O, C, C), 0.25),  b3=u(ks[7], (O, C, 1), 0.5),
        g3=1.0 + u(ks[8], (O, C, 1), 0.1), be3=u(ks[9], (O, C, 1), 0.1),
        wl=u(ks[10], (O, 1, C), 0.25), bl=u(ks[11], (O, 1, 1), 0.5),
    )


def ref_level(x_nol, p):
    """Pure-JAX reference with the module's math (two-pass BN, biases kept)."""
    N, O, L = x_nol.shape
    M = N * L
    outs = []
    for o in range(O):
        xm = x_nol[:, o, :].reshape(1, M)
        h = jnp.maximum(p["w1"][o] * xm + p["b1"][o], 0.0)
        for W, b, g, be in ((p["W2"][o], p["b2"][o], p["g2"][o], p["be2"][o]),
                            (p["W3"][o], p["b3"][o], p["g3"][o], p["be3"][o])):
            z = W @ h + b
            mu = jnp.mean(z, axis=1, keepdims=True)
            var = jnp.mean((z - mu) ** 2, axis=1, keepdims=True)
            h = jnp.maximum((z - mu) * jax.lax.rsqrt(var + EPS) * g + be, 0.0)
        y = p["wl"][o] @ h + p["bl"][o]
        outs.append(y.reshape(N, L))
    return jnp.stack(outs, axis=1)


if __name__ == "__main__":
    max_level, max_orient = 2, 4
    N = 2
    lengths = {1: 64, 2: 32}   # wavelet levels may have different lengths

    key = jax.random.PRNGKey(0)
    k_in, k_par = jax.random.split(key)

    # input_list[0] is only length-checked by the reference forward; it is never processed.
    input_list = [jax.random.normal(jax.random.fold_in(k_in, 0), (N, 1, lengths[1]), jnp.float32)]
    for level in (1, 2):
        input_list.append(jax.random.normal(jax.random.fold_in(k_in, level),
                                            (N, max_orient, lengths[level]), jnp.float32))

    level_params = [init_level_params(jax.random.fold_in(k_par, level), max_orient)
                    for level in (1, 2)]

    out_list = denoising_nn_forward(input_list, level_params)
    out_list = jax.block_until_ready(out_list)

    # verify against a pure-JAX reference of the module's math
    for level in (1, 2):
        ref = ref_level(input_list[level], level_params[level - 1])
        np.testing.assert_allclose(np.asarray(out_list[level]), np.asarray(ref),
                                   rtol=2e-4, atol=2e-4)
    np.testing.assert_allclose(np.asarray(out_list[0]),
                               np.asarray(out_list[1][:, :1]), rtol=0, atol=0)

    print("KERNEL_OK")
</pallas_src>

<mosaic_0001>
module attributes {stable_mosaic.version = 11 : i64} {
  func.func @_level_kernel(%arg0: i32, %arg1: memref<1x4x128xf32, #tpu.memory_space<vmem>>, %arg2: memref<1x2x64x64xf32, #tpu.memory_space<vmem>>, %arg3: memref<1x64x128xf32, #tpu.memory_space<vmem>>, %arg4: memref<1x4x128xf32, #tpu.memory_space<vmem>>, %arg5: memref<1x4x128xf32, #tpu.memory_space<vmem>>) attributes {dimension_semantics = [#tpu.dimension_semantics<parallel>], iteration_bounds = array<i64: 1>, scalar_prefetch = 0 : i64, scratch_operands = 0 : i64, tpu.core_type = #tpu.core_type<tc>, window_params = [{transform_indices = @transform_0, window_bounds = array<i64: 1, 4, 128>}, {transform_indices = @transform_1, window_bounds = array<i64: 1, 2, 64, 64>}, {transform_indices = @transform_2, window_bounds = array<i64: 1, 64, 128>}, {transform_indices = @transform_3, window_bounds = array<i64: 1, 4, 128>}, {transform_indices = @transform_4, window_bounds = array<i64: 1, 4, 128>}]} {
    %c0 = arith.constant 0 : index
    %c0_0 = arith.constant 0 : index
    %c0_1 = arith.constant 0 : index
    %0 = vector.load %arg1[%c0, %c0_0, %c0_1] : memref<1x4x128xf32, #tpu.memory_space<vmem>>, vector<1x4x128xf32>
    %1 = vector.shape_cast %0 : vector<1x4x128xf32> to vector<4x128xf32>
    %c0_2 = arith.constant 0 : index
    %c0_3 = arith.constant 0 : index
    %c0_4 = arith.constant 0 : index
    %2 = vector.load %arg3[%c0_2, %c0_3, %c0_4] : memref<1x64x128xf32, #tpu.memory_space<vmem>>, vector<1x64x128xf32>
    %3 = vector.shape_cast %2 : vector<1x64x128xf32> to vector<64x128xf32>
    %c0_5 = arith.constant 0 : index
    %c0_6 = arith.constant 0 : index
    %c0_7 = arith.constant 0 : index
    %4 = vector.load %arg4[%c0_5, %c0_6, %c0_7] : memref<1x4x128xf32, #tpu.memory_space<vmem>>, vector<1x4x128xf32>
    %5 = vector.shape_cast %4 : vector<1x4x128xf32> to vector<4x128xf32>
    %6 = vector.extract_strided_slice %3 {offsets = [0, 0], sizes = [64, 4], strides = [1, 1]} : vector<64x128xf32> to vector<64x4xf32>
    %7 = vector.extract_strided_slice %3 {offsets = [0, 4], sizes = [64, 1], strides = [1, 1]} : vector<64x128xf32> to vector<64x1xf32>
    %8 = vector.extract_strided_slice %3 {offsets = [0, 5], sizes = [64, 1], strides = [1, 1]} : vector<64x128xf32> to vector<64x1xf32>
    %9 = vector.extract_strided_slice %3 {offsets = [0, 6], sizes = [64, 1], strides = [1, 1]} : vector<64x128xf32> to vector<64x1xf32>
    %10 = vector.extract_strided_slice %3 {offsets = [0, 7], sizes = [64, 1], strides = [1, 1]} : vector<64x128xf32> to vector<64x1xf32>
    %11 = vector.extract_strided_slice %3 {offsets = [0, 8], sizes = [64, 1], strides = [1, 1]} : vector<64x128xf32> to vector<64x1xf32>
    %12 = vector.extract_strided_slice %5 {offsets = [0, 0], sizes = [4, 64], strides = [1, 1]} : vector<4x128xf32> to vector<4x64xf32>
    %13 = vector.extract_strided_slice %5 {offsets = [0, 64], sizes = [4, 1], strides = [1, 1]} : vector<4x128xf32> to vector<4x1xf32>
    %cst = arith.constant dense<0.000000e+00> : vector<64x128xf32>
    %14 = tpu.matmul %6, %1, %cst {dimension_numbers = #tpu.dot_dimension_numbers<[1], [0], [0], [1], [0, 0, 1, 1], [], []>} : vector<64x4xf32>, vector<4x128xf32>, vector<64x128xf32> -> vector<64x128xf32>
    %15 = vector.broadcast %7 : vector<64x1xf32> to vector<64x128xf32>
    %16 = arith.addf %14, %15 : vector<64x128xf32>
    %cst_8 = arith.constant 0.000000e+00 : f32
    %17 = vector.broadcast %cst_8 : f32 to vector<64x128xf32>
    %18 = arith.maximumf %16, %17 : vector<64x128xf32>
    %c0_9 = arith.constant 0 : index
    %c0_10 = arith.constant 0 : index
    %c0_11 = arith.constant 0 : index
    %c0_12 = arith.constant 0 : index
    %19 = vector.load %arg2[%c0_9, %c0_10, %c0_11, %c0_12] : memref<1x2x64x64xf32, #tpu.memory_space<vmem>>, vector<1x1x64x64xf32>
    %20 = vector.shape_cast %19 : vector<1x1x64x64xf32> to vector<64x64xf32>
    %cst_13 = arith.constant dense<0.000000e+00> : vector<64x128xf32>
    %21 = tpu.matmul %20, %18, %cst_13 {dimension_numbers = #tpu.dot_dimension_numbers<[1], [0], [0], [1], [0, 0, 1, 1], [], []>} : vector<64x64xf32>, vector<64x128xf32>, vector<64x128xf32> -> vector<64x128xf32>
    %cst_14 = arith.constant dense<0.000000e+00> : vector<64xf32>
    %22 = vector.multi_reduction <add>, %21, %cst_14 [1] : vector<64x128xf32> to vector<64xf32>
    %23 = vector.shape_cast %22 : vector<64xf32> to vector<64x1xf32>
    %24 = arith.mulf %21, %21 : vector<64x128xf32>
    %cst_15 = arith.constant dense<0.000000e+00> : vector<64xf32>
    %25 = vector.multi_reduction <add>, %24, %cst_15 [1] : vector<64x128xf32> to vector<64xf32>
    %26 = vector.shape_cast %25 : vector<64xf32> to vector<64x1xf32>
    %cst_16 = arith.constant 7.812500e-03 : f32
    %27 = vector.broadcast %cst_16 : f32 to vector<64x1xf32>
    %28 = arith.mulf %23, %27 : vector<64x1xf32>
    %cst_17 = arith.constant 7.812500e-03 : f32
    %29 = vector.broadcast %cst_17 : f32 to vector<64x1xf32>
    %30 = arith.mulf %26, %29 : vector<64x1xf32>
    %31 = arith.mulf %28, %28 : vector<64x1xf32>
    %32 = arith.subf %30, %31 : vector<64x1xf32>
    %cst_18 = arith.constant 0.000000e+00 : f32
    %33 = vector.broadcast %cst_18 : f32 to vector<64x1xf32>
    %34 = arith.maximumf %32, %33 : vector<64x1xf32>
    %cst_19 = arith.constant 9.99999974E-6 : f32
    %35 = vector.broadcast %cst_19 : f32 to vector<64x1xf32>
    %36 = arith.addf %34, %35 : vector<64x1xf32>
    %37 = math.rsqrt %36 : vector<64x1xf32>
    %38 = arith.mulf %8, %37 : vector<64x1xf32>
    %39 = arith.mulf %28, %38 : vector<64x1xf32>
    %40 = arith.subf %9, %39 : vector<64x1xf32>
    %41 = vector.broadcast %38 : vector<64x1xf32> to vector<64x128xf32>
    %42 = arith.mulf %21, %41 : vector<64x128xf32>
    %43 = vector.broadcast %40 : vector<64x1xf32> to vector<64x128xf32>
    %44 = arith.addf %42, %43 : vector<64x128xf32>
    %cst_20 = arith.constant 0.000000e+00 : f32
    %45 = vector.broadcast %cst_20 : f32 to vector<64x128xf32>
    %46 = arith.maximumf %44, %45 : vector<64x128xf32>
    %c0_21 = arith.constant 0 : index
    %c1 = arith.constant 1 : index
    %c0_22 = arith.constant 0 : index
    %c0_23 = arith.constant 0 : index
    %47 = vector.load %arg2[%c0_21, %c1, %c0_22, %c0_23] : memref<1x2x64x64xf32, #tpu.memory_space<vmem>>, vector<1x1x64x64xf32>
    %48 = vector.shape_cast %47 : vector<1x1x64x64xf32> to vector<64x64xf32>
    %cst_24 = arith.constant dense<0.000000e+00> : vector<64x128xf32>
    %49 = tpu.matmul %48, %46, %cst_24 {dimension_numbers = #tpu.dot_dimension_numbers<[1], [0], [0], [1], [0, 0, 1, 1], [], []>} : vector<64x64xf32>, vector<64x128xf32>, vector<64x128xf32> -> vector<64x128xf32>
    %cst_25 = arith.constant dense<0.000000e+00> : vector<64xf32>
    %50 = vector.multi_reduction <add>, %49, %cst_25 [1] : vector<64x128xf32> to vector<64xf32>
    %51 = vector.shape_cast %50 : vector<64xf32> to vector<64x1xf32>
    %52 = arith.mulf %49, %49 : vector<64x128xf32>
    %cst_26 = arith.constant dense<0.000000e+00> : vector<64xf32>
    %53 = vector.multi_reduction <add>, %52, %cst_26 [1] : vector<64x128xf32> to vector<64xf32>
    %54 = vector.shape_cast %53 : vector<64xf32> to vector<64x1xf32>
    %cst_27 = arith.constant 7.812500e-03 : f32
    %55 = vector.broadcast %cst_27 : f32 to vector<64x1xf32>
    %56 = arith.mulf %51, %55 : vector<64x1xf32>
    %cst_28 = arith.constant 7.812500e-03 : f32
    %57 = vector.broadcast %cst_28 : f32 to vector<64x1xf32>
    %58 = arith.mulf %54, %57 : vector<64x1xf32>
    %59 = arith.mulf %56, %56 : vector<64x1xf32>
    %60 = arith.subf %58, %59 : vector<64x1xf32>
    %cst_29 = arith.constant 0.000000e+00 : f32
    %61 = vector.broadcast %cst_29 : f32 to vector<64x1xf32>
    %62 = arith.maximumf %60, %61 : vector<64x1xf32>
    %cst_30 = arith.constant 9.99999974E-6 : f32
    %63 = vector.broadcast %cst_30 : f32 to vector<64x1xf32>
    %64 = arith.addf %62, %63 : vector<64x1xf32>
    %65 = math.rsqrt %64 : vector<64x1xf32>
    %66 = arith.mulf %10, %65 : vector<64x1xf32>
    %67 = arith.mulf %56, %66 : vector<64x1xf32>
    %68 = arith.subf %11, %67 : vector<64x1xf32>
    %69 = vector.broadcast %66 : vector<64x1xf32> to vector<64x128xf32>
    %70 = arith.mulf %49, %69 : vector<64x128xf32>
    %71 = vector.broadcast %68 : vector<64x1xf32> to vector<64x128xf32>
    %72 = arith.addf %70, %71 : vector<64x128xf32>
    %cst_31 = arith.constant 0.000000e+00 : f32
    %73 = vector.broadcast %cst_31 : f32 to vector<64x128xf32>
    %74 = arith.maximumf %72, %73 : vector<64x128xf32>
    %cst_32 = arith.constant dense<0.000000e+00> : vector<4x128xf32>
    %75 = tpu.matmul %12, %74, %cst_32 {dimension_numbers = #tpu.dot_dimension_numbers<[1], [0], [0], [1], [0, 0, 1, 1], [], []>} : vector<4x64xf32>, vector<64x128xf32>, vector<4x128xf32> -> vector<4x128xf32>
    %76 = vector.broadcast %13 : vector<4x1xf32> to vector<4x128xf32>
    %77 = arith.addf %75, %76 : vector<4x128xf32>
    %c0_33 = arith.constant 0 : index
    %c0_34 = arith.constant 0 : index
    %c0_35 = arith.constant 0 : index
    %78 = vector.load %arg5[%c0_33, %c0_34, %c0_35] : memref<1x4x128xf32, #tpu.memory_space<vmem>>, vector<1x4x128xf32>
    %79 = vector.shape_cast %78 : vector<1x4x128xf32> to vector<4x128xf32>
    %80 = vector.shape_cast %77 : vector<4x128xf32> to vector<1x4x128xf32>
    tpu.vector_store %arg5[%c0_33, %c0_34, %c0_35], %80 {strides = array<i32>} : memref<1x4x128xf32, #tpu.memory_space<vmem>>, vector<1x4x128xf32>,
    return
  }
  func.func @transform_0(%arg0: i32) -> (i32, i32, i32) {
    %c0_i32 = arith.constant 0 : i32
    %c0_i32_0 = arith.constant 0 : i32
    %c0_i32_1 = arith.constant 0 : i32
    return %arg0, %c0_i32, %c0_i32_0 : i32, i32, i32
  }
  func.func @transform_1(%arg0: i32) -> (i32, i32, i32, i32) {
    %c0_i32 = arith.constant 0 : i32
    %c0_i32_0 = arith.constant 0 : i32
    %c0_i32_1 = arith.constant 0 : i32
    %c0_i32_2 = arith.constant 0 : i32
    return %arg0, %c0_i32, %c0_i32_0, %c0_i32_1 : i32, i32, i32, i32
  }
  func.func @transform_2(%arg0: i32) -> (i32, i32, i32) {
    %c0_i32 = arith.constant 0 : i32
    %c0_i32_0 = arith.constant 0 : i32
    %c0_i32_1 = arith.constant 0 : i32
    return %arg0, %c0_i32, %c0_i32_0 : i32, i32, i32
  }
  func.func @transform_3(%arg0: i32) -> (i32, i32, i32) {
    %c0_i32 = arith.constant 0 : i32
    %c0_i32_0 = arith.constant 0 : i32
    %c0_i32_1 = arith.constant 0 : i32
    return %arg0, %c0_i32, %c0_i32_0 : i32, i32, i32
  }
  func.func @transform_4(%arg0: i32) -> (i32, i32, i32) {
    %c0_i32 = arith.constant 0 : i32
    %c0_i32_0 = arith.constant 0 : i32
    %c0_i32_1 = arith.constant 0 : i32
    return %arg0, %c0_i32, %c0_i32_0 : i32, i32, i32
  }
}

</mosaic_0001>

<llo_original>
// kernel: tpu_custom_call.1
$region0: #{tpu_custom_call.1}
  #allocation0 [shape = 'u32[]', space=smem, size = 0x4, offset = 0x4, fixed_abs, tag = 'smem constant byte address 0x4 - core index']
  #allocation1 [shape = 'u32[72,128]{1,0:T(1,128)}', space=vmem, size = 0x9000, scoped, tag = 'internal scratch']
  %s0 = inlined_call_operand.hbm [shape: f32[1,4,128], index: 0, kind: input, shape index: {}]
  %s1 = inlined_call_operand.hbm [shape: f32[1,2,64,64], index: 1, kind: input, shape index: {}]
  %s2 = inlined_call_operand.hbm [shape: f32[1,64,128], index: 2, kind: input, shape index: {}]
  %s3 = inlined_call_operand.hbm [shape: f32[1,4,128], index: 3, kind: input, shape index: {}]
  %s4 = inlined_call_operand.hbm [shape: f32[1,4,128], index: 4, kind: output, shape index: {}]
  %s5 = sld [smem:[#allocation0]]
  $region42: #{tpu_custom_call.1} parent=0
    _
  %s7 = ssub.s32 1, %s5
  %s8 = scalar_select 0, %s7, %s5
  $region1: #{tpu_custom_call.1} parent=0
    #allocation2 [shape = 'u8[2048]{0}', space=vmem, size = 0x800, scoped, tag = 'input window, operand 0, single buffered']
    #allocation3 [shape = 's32[1]{0}', space=sflag, size = 0x4, scoped, tag = 'scoped memory for tpu_custom_call.1']
    #allocation4 [shape = 's32[1]{0}', space=sflag, size = 0x4, scoped, tag = 'scoped memory for tpu_custom_call.1']
    #allocation5 [shape = 'u8[65536]{0}', space=vmem, size = 0x10000, scoped, tag = 'input window, operand 1, single buffered']
    #allocation6 [shape = 's32[1]{0}', space=sflag, size = 0x4, scoped, tag = 'scoped memory for tpu_custom_call.1']
    #allocation7 [shape = 'u8[32768]{0}', space=vmem, size = 0x8000, scoped, tag = 'input window, operand 2, single buffered']
    #allocation8 [shape = 'u8[2048]{0}', space=vmem, size = 0x800, scoped, tag = 'input window, operand 3, single buffered']
    #allocation9 [shape = 's32[1]{0}', space=sflag, size = 0x4, scoped, tag = 'scoped memory for tpu_custom_call.1']
    #allocation10 [shape = 'u8[2048]{0}', space=vmem, size = 0x800, scoped, tag = 'output window, operand 0, single buffered']
    %9 = vsyncpa [#allocation3], 0
    %10 = vsyncpa [#allocation6], 0
    %11 = vsyncpa [#allocation9], 0
    %12 = vsyncpa [#allocation4], 0
    // Predicated region
    $region2: #{tpu_custom_call.1} parent=1 // pred_check
      _
    $region3: #{tpu_custom_call.1} parent=1 // pred_check_branch
      %14 = sbr.rel (0) target = $region5
    $region4: #{tpu_custom_call.1} parent=1 // pred_region
      %16 = vsyncadd [#allocation3], 0
      %s18 = sshll.u32 %s0, 4
      %s19 = int_to_ptr.hbm [resolvable:$true] %s18
      %s20 = sshll.u32 [#allocation2], 4
      %s21 = int_to_ptr.vmem [resolvable:$true] %s20
      %23 = dma.hbm_to_vmem [thread:$0]  %s19, 64, %s21, [#allocation3]
    $region5: #{tpu_custom_call.1} parent=1 // pred_fallthru
      _
    // Predicated region
    $region6: #{tpu_custom_call.1} parent=1 // pred_check
      _
    $region7: #{tpu_custom_call.1} parent=1 // pred_check_branch
      %25 = sbr.rel (0) target = $region9
    $region8: #{tpu_custom_call.1} parent=1 // pred_region
      %27 = vsyncadd [#allocation6], 0
      %s28 = sshll.u32 %s1, 4
      %s29 = int_to_ptr.hbm [resolvable:$true] %s28
      %s30 = sshll.u32 [#allocation5], 4
      %s31 = int_to_ptr.vmem [resolvable:$true] %s30
      %36 = dma.hbm_to_vmem [thread:$0]  %s29, 2048, %s31, [#allocation6], 128, 128, 8
    $region9: #{tpu_custom_call.1} parent=1 // pred_fallthru
      _
    // Predicated region
    $region10: #{tpu_custom_call.1} parent=1 // pred_check
      _
    $region11: #{tpu_custom_call.1} parent=1 // pred_check_branch
      %38 = sbr.rel (0) target = $region13
    $region12: #{tpu_custom_call.1} parent=1 // pred_region
      %40 = vsyncadd [#allocation6], 0
      %s41 = sshll.u32 %s2, 4
      %s42 = int_to_ptr.hbm [resolvable:$true] %s41
      %s43 = sshll.u32 [#allocation7], 4
      %s44 = int_to_ptr.vmem [resolvable:$true] %s43
      %49 = dma.hbm_to_vmem [thread:$0]  %s42, 1024, %s44, [#allocation6], 128, 128, 8
    $region13: #{tpu_custom_call.1} parent=1 // pred_fallthru
      _
    // Predicated region
    $region14: #{tpu_custom_call.1} parent=1 // pred_check
      _
    $region15: #{tpu_custom_call.1} parent=1 // pred_check_branch
      %51 = sbr.rel (0) target = $region17
    $region16: #{tpu_custom_call.1} parent=1 // pred_region
      %53 = vsyncadd [#allocation9], 0
      %s55 = sshll.u32 %s3, 4
      %s56 = int_to_ptr.hbm [resolvable:$true] %s55
      %s57 = sshll.u32 [#allocation8], 4
      %s58 = int_to_ptr.vmem [resolvable:$true] %s57
      %60 = dma.hbm_to_vmem [thread:$0]  %s56, 64, %s58, [#allocation9]
    $region17: #{tpu_custom_call.1} parent=1 // pred_fallthru
      _
    // Predicated region
    $region18: #{tpu_custom_call.1} parent=1 // pred_check
      _
    $region19: #{tpu_custom_call.1} parent=1 // pred_check_branch
      %62 = sbr.rel (0) target = $region21
    $region20: #{tpu_custom_call.1} parent=1 // pred_region
      %64 = dma.done [#allocation3], 64
    $region21: #{tpu_custom_call.1} parent=1 // pred_fallthru
      _
    // Predicated region
    $region22: #{tpu_custom_call.1} parent=1 // pred_check
      _
    $region23: #{tpu_custom_call.1} parent=1 // pred_check_branch
      %66 = sbr.rel (0) target = $region25
    $region24: #{tpu_custom_call.1} parent=1 // pred_region
      %68 = dma.done [#allocation6], 2048
    $region25: #{tpu_custom_call.1} parent=1 // pred_fallthru
      _
    // Predicated region
    $region26: #{tpu_custom_call.1} parent=1 // pred_check
      _
    $region27: #{tpu_custom_call.1} parent=1 // pred_check_branch
      %70 = sbr.rel (0) target = $region29
    $region28: #{tpu_custom_call.1} parent=1 // pred_region
      %72 = dma.done [#allocation6], 1024
    $region29: #{tpu_custom_call.1} parent=1 // pred_fallthru
      _
    // Predicated region
    $region30: #{tpu_custom_call.1} parent=1 // pred_check
      _
    $region31: #{tpu_custom_call.1} parent=1 // pred_check_branch
      %74 = sbr.rel (0) target = $region33
    $region32: #{tpu_custom_call.1} parent=1 // pred_region
      %76 = dma.done [#allocation9], 64
    $region33: #{tpu_custom_call.1} parent=1 // pred_fallthru
      _
    %v77 = vld [vmem:[#allocation2] sm:$0xf]
    %v78 = vld [vmem:[#allocation7] sm:$0xff]
    %v79 = vld [vmem:[#allocation7 + $0x8] sm:$0xff]
    %v80 = vld [vmem:[#allocation7 + $0x10] sm:$0xff]
    %v81 = vld [vmem:[#allocation7 + $0x18] sm:$0xff]
    %v82 = vld [vmem:[#allocation7 + $0x20] sm:$0xff]
    %v83 = vld [vmem:[#allocation7 + $0x28] sm:$0xff]
    %v84 = vld [vmem:[#allocation7 + $0x30] sm:$0xff]
    %v85 = vld [vmem:[#allocation7 + $0x38] sm:$0xff]
    %v86 = vld [vmem:[#allocation8] sm:$0xf]
    %88 = vset.pattern.permute.xlu0 4
    %89 = vperm.xlu0 %88, %v78
    %v90 = vpop.permute.xlu0 %89
    %93 = vset.pattern.permute.xlu0 4
    %94 = vperm.xlu0 %93, %v79
    %v95 = vpop.permute.xlu0 %94
    %98 = vset.pattern.permute.xlu0 4
    %99 = vperm.xlu0 %98, %v80
    %v100 = vpop.permute.xlu0 %99
    %103 = vset.pattern.permute.xlu0 4
    %104 = vperm.xlu0 %103, %v81
    %v105 = vpop.permute.xlu0 %104
    %108 = vset.pattern.permute.xlu0 4
    %109 = vperm.xlu0 %108, %v82
    %v110 = vpop.permute.xlu0 %109
    %113 = vset.pattern.permute.xlu0 4
    %114 = vperm.xlu0 %113, %v83
    %v115 = vpop.permute.xlu0 %114
    %118 = vset.pattern.permute.xlu0 4
    %119 = vperm.xlu0 %118, %v84
    %v120 = vpop.permute.xlu0 %119
    %123 = vset.pattern.permute.xlu0 4
    %124 = vperm.xlu0 %123, %v85
    %v125 = vpop.permute.xlu0 %124
    %vm127 = vcmask 31744
    %v128 = vsel %vm127, %v78, 0
    %v130 = vsel %vm127, %v79, 0
    %v132 = vsel %vm127, %v80, 0
    %v134 = vsel %vm127, %v81, 0
    %v136 = vsel %vm127, %v82, 0
    %v138 = vsel %vm127, %v83, 0
    %v140 = vsel %vm127, %v84, 0
    %v142 = vsel %vm127, %v85, 0
    %vm144 = vcmask 1043456
    %v146 = vsel %vm144, %v77, 0
    %148 = vmatpush.msra.mxu0 0.0
    %149 = vmatpush.msra.mxu0 0.0
    %150 = vmatpush.msra.mxu0 0.0
    %151 = vmatpush.msra.mxu0 0.0
    %152 = vmatpush.msra.mxu0 0.0
    %153 = vmatpush.msra.mxu0 0.0
    %154 = vmatpush.msra.mxu0 0.0
    %155 = vmatpush.msra.mxu0 0.0
    %156 = vmatpush.msra.mxu0 0.0
    %157 = vmatpush.msra.mxu0 0.0
    %158 = vmatpush.msra.mxu0 0.0
    %159 = vmatpush.msra.mxu0 0.0
    %160 = vmatpush.msra.mxu0 0.0
    %161 = vmatpush.msra.mxu0 0.0
    %162 = vmatpush.msra.mxu0 0.0
    %163 = vmatpush.msra.mxu0 %v146
    %164 = vmatmul.f32.gmra.mxu0 %v128
    %v165 = vpop.f32.mrf.mxu0
    %v166 = vadd.f32 %v90, %v165
    %167 = vmatmul.f32.gmra.mxu0 %v130
    %v168 = vpop.f32.mrf.mxu0
    %v169 = vadd.f32 %v95, %v168
    %170 = vmatmul.f32.gmra.mxu0 %v132
    %v171 = vpop.f32.mrf.mxu0
    %v172 = vadd.f32 %v100, %v171
    %173 = vmatmul.f32.gmra.mxu0 %v134
    %v174 = vpop.f32.mrf.mxu0
    %v175 = vadd.f32 %v105, %v174
    %176 = vmatmul.f32.gmra.mxu0 %v136
    %v177 = vpop.f32.mrf.mxu0
    %v178 = vadd.f32 %v110, %v177
    %179 = vmatmul.f32.gmra.mxu0 %v138
    %v180 = vpop.f32.mrf.mxu0
    %v181 = vadd.f32 %v115, %v180
    %182 = vmatmul.f32.gmra.mxu0 %v140
    %v183 = vpop.f32.mrf.mxu0
    %v184 = vadd.f32 %v120, %v183
    %185 = vmatmul.f32.gmra.mxu0 %v142
    %v186 = vpop.f32.mrf.mxu0
    %v187 = vadd.f32 %v125, %v186
    %188 = vdwg.mxu0
    %v189 = vmax.f32 %v166, 0.0
    %v190 = vmax.f32 %v169, 0.0
    %v191 = vmax.f32 %v172, 0.0
    %v192 = vmax.f32 %v175, 0.0
    %v193 = vmax.f32 %v178, 0.0
    %v194 = vmax.f32 %v181, 0.0
    %v195 = vmax.f32 %v184, 0.0
    %v196 = vmax.f32 %v187, 0.0
    %v197 = vld [vmem:[#allocation5] sm:$0xff]
    %v198 = vld [vmem:[#allocation5 + $0x8] sm:$0xff]
    %v199 = vld [vmem:[#allocation5 + $0x10] sm:$0xff]
    %v200 = vld [vmem:[#allocation5 + $0x18] sm:$0xff]
    %v201 = vld [vmem:[#allocation5 + $0x20] sm:$0xff]
    %v202 = vld [vmem:[#allocation5 + $0x28] sm:$0xff]
    %v203 = vld [vmem:[#allocation5 + $0x30] sm:$0xff]
    %v204 = vld [vmem:[#allocation5 + $0x38] sm:$0xff]
    %vm205 = vcmask 523264
    %v207 = vsel %vm205, %v197, 0
    %v210 = vsel %vm205, %v198, 0
    %v213 = vsel %vm205, %v199, 0
    %v216 = vsel %vm205, %v200, 0
    %v219 = vsel %vm205, %v201, 0
    %v222 = vsel %vm205, %v202, 0
    %v225 = vsel %vm205, %v203, 0
    %v228 = vsel %vm205, %v204, 0
    %230 = vmatpush.msra.mxu0 0.0
    %231 = vmatpush.msra.mxu0 0.0
    %232 = vmatpush.msra.mxu0 0.0
    %233 = vmatpush.msra.mxu0 0.0
    %234 = vmatpush.msra.mxu0 0.0
    %235 = vmatpush.msra.mxu0 0.0
    %236 = vmatpush.msra.mxu0 0.0
    %237 = vmatpush.msra.mxu0 0.0
    %238 = vmatpush.msra.mxu0 %v196
    %239 = vmatpush.msra.mxu0 %v195
    %240 = vmatpush.msra.mxu0 %v194
    %241 = vmatpush.msra.mxu0 %v193
    %242 = vmatpush.msra.mxu0 %v192
    %243 = vmatpush.msra.mxu0 %v191
    %244 = vmatpush.msra.mxu0 %v190
    %245 = vmatpush.msra.mxu0 %v189
    %246 = vmatmul.f32.gmra.mxu0 %v207
    %v247 = vpop.f32.mrf.mxu0
    %v248 = vadd.f32 0.0, %v247
    %249 = vmatmul.f32.gmra.mxu0 %v210
    %v250 = vpop.f32.mrf.mxu0
    %v251 = vadd.f32 0.0, %v250
    %252 = vmatmul.f32.gmra.mxu0 %v213
    %v253 = vpop.f32.mrf.mxu0
    %v254 = vadd.f32 0.0, %v253
    %255 = vmatmul.f32.gmra.mxu0 %v216
    %v256 = vpop.f32.mrf.mxu0
    %v257 = vadd.f32 0.0, %v256
    %258 = vmatmul.f32.gmra.mxu0 %v219
    %v259 = vpop.f32.mrf.mxu0
    %v260 = vadd.f32 0.0, %v259
    %261 = vmatmul.f32.gmra.mxu0 %v222
    %v262 = vpop.f32.mrf.mxu0
    %v263 = vadd.f32 0.0, %v262
    %264 = vmatmul.f32.gmra.mxu0 %v225
    %v265 = vpop.f32.mrf.mxu0
    %v266 = vadd.f32 0.0, %v265
    %267 = vmatmul.f32.gmra.mxu0 %v228
    %v268 = vpop.f32.mrf.mxu0
    %v269 = vadd.f32 0.0, %v268
    %270 = vdwg.mxu0
    %271 = vadd.xlane.f32.xlu0 %v248
    %v272 = vpop.xlane.xlu0 %271
    %273 = vadd.xlane.f32.xlu0 %v251
    %v274 = vpop.xlane.xlu0 %273
    %275 = vadd.xlane.f32.xlu0 %v254
    %v276 = vpop.xlane.xlu0 %275
    %277 = vadd.xlane.f32.xlu0 %v257
    %v278 = vpop.xlane.xlu0 %277
    %279 = vadd.xlane.f32.xlu0 %v260
    %v280 = vpop.xlane.xlu0 %279
    %281 = vadd.xlane.f32.xlu0 %v263
    %v282 = vpop.xlane.xlu0 %281
    %283 = vadd.xlane.f32.xlu0 %v266
    %v284 = vpop.xlane.xlu0 %283
    %285 = vadd.xlane.f32.xlu0 %v269
    %v286 = vpop.xlane.xlu0 %285
    %v287 = vmul.f32 %v248, %v248
    %v288 = vmul.f32 %v251, %v251
    %v289 = vmul.f32 %v254, %v254
    %v290 = vmul.f32 %v257, %v257
    %v291 = vmul.f32 %v260, %v260
    %v292 = vmul.f32 %v263, %v263
    %v293 = vmul.f32 %v266, %v266
    %v294 = vmul.f32 %v269, %v269
    %295 = vadd.xlane.f32.xlu0 %v287
    %v296 = vpop.xlane.xlu0 %295
    %297 = vadd.xlane.f32.xlu0 %v288
    %v298 = vpop.xlane.xlu0 %297
    %299 = vadd.xlane.f32.xlu0 %v289
    %v300 = vpop.xlane.xlu0 %299
    %301 = vadd.xlane.f32.xlu0 %v290
    %v302 = vpop.xlane.xlu0 %301
    %303 = vadd.xlane.f32.xlu0 %v291
    %v304 = vpop.xlane.xlu0 %303
    %305 = vadd.xlane.f32.xlu0 %v292
    %v306 = vpop.xlane.xlu0 %305
    %307 = vadd.xlane.f32.xlu0 %v293
    %v308 = vpop.xlane.xlu0 %307
    %309 = vadd.xlane.f32.xlu0 %v294
    %v310 = vpop.xlane.xlu0 %309
    %v311 = vmul.f32 %v272, 0.0078125
    %v312 = vmul.f32 %v274, 0.0078125
    %v313 = vmul.f32 %v276, 0.0078125
    %v314 = vmul.f32 %v278, 0.0078125
    %v315 = vmul.f32 %v280, 0.0078125
    %v316 = vmul.f32 %v282, 0.0078125
    %v317 = vmul.f32 %v284, 0.0078125
    %v318 = vmul.f32 %v286, 0.0078125
    %v319 = vmul.f32 %v296, 0.0078125
    %v320 = vmul.f32 %v298, 0.0078125
    %v321 = vmul.f32 %v300, 0.0078125
    %v322 = vmul.f32 %v302, 0.0078125
    %v323 = vmul.f32 %v304, 0.0078125
    %v324 = vmul.f32 %v306, 0.0078125
    %v325 = vmul.f32 %v308, 0.0078125
    %v326 = vmul.f32 %v310, 0.0078125
    %v327 = vmul.f32 %v311, %v311
    %v328 = vmul.f32 %v312, %v312
    %v329 = vmul.f32 %v313, %v313
    %v330 = vmul.f32 %v314, %v314
    %v331 = vmul.f32 %v315, %v315
    %v332 = vmul.f32 %v316, %v316
    %v333 = vmul.f32 %v317, %v317
    %v334 = vmul.f32 %v318, %v318
    %v335 = vsub.f32 %v319, %v327
    %v336 = vsub.f32 %v320, %v328
    %v337 = vsub.f32 %v321, %v329
    %v338 = vsub.f32 %v322, %v330
    %v339 = vsub.f32 %v323, %v331
    %v340 = vsub.f32 %v324, %v332
    %v341 = vsub.f32 %v325, %v333
    %v342 = vsub.f32 %v326, %v334
    %v343 = vmax.f32 %v335, 0.0
    %v344 = vmax.f32 %v336, 0.0
    %v345 = vmax.f32 %v337, 0.0
    %v346 = vmax.f32 %v338, 0.0
    %v347 = vmax.f32 %v339, 0.0
    %v348 = vmax.f32 %v340, 0.0
    %v349 = vmax.f32 %v341, 0.0
    %v350 = vmax.f32 %v342, 0.0
    %v351 = vadd.f32 %v343, 1e-05
    %v352 = vadd.f32 %v344, 1e-05
    %v353 = vadd.f32 %v345, 1e-05
    %v354 = vadd.f32 %v346, 1e-05
    %v355 = vadd.f32 %v347, 1e-05
    %v356 = vadd.f32 %v348, 1e-05
    %v357 = vadd.f32 %v349, 1e-05
    %v358 = vadd.f32 %v350, 1e-05
    %v359 = vrsqrt.pop %v351
    %v360 = vmul.f32 %v359, %v351
    %v361 = vmul.f32 %v360, %v359
    %v362 = vmul.f32 0.5, %v361
    %v363 = vsub.f32 1.5, %v362
    %v364 = vmul.f32 %v359, %v363
    %vm365 = vweird.f32 %v351
    %vm366 = vweird.f32 %v359
    %vm367 = vmor %vm365, %vm366
    %v368 = vsel %vm367, %v359, %v364
    %v369 = vrsqrt.pop %v352
    %v370 = vmul.f32 %v369, %v352
    %v371 = vmul.f32 %v370, %v369
    %v372 = vmul.f32 0.5, %v371
    %v373 = vsub.f32 1.5, %v372
    %v374 = vmul.f32 %v369, %v373
    %vm375 = vweird.f32 %v352
    %vm376 = vweird.f32 %v369
    %vm377 = vmor %vm375, %vm376
    %v378 = vsel %vm377, %v369, %v374
    %v379 = vrsqrt.pop %v353
    %v380 = vmul.f32 %v379, %v353
    %v381 = vmul.f32 %v380, %v379
    %v382 = vmul.f32 0.5, %v381
    %v383 = vsub.f32 1.5, %v382
    %v384 = vmul.f32 %v379, %v383
    %vm385 = vweird.f32 %v353
    %vm386 = vweird.f32 %v379
    %vm387 = vmor %vm385, %vm386
    %v388 = vsel %vm387, %v379, %v384
    %v389 = vrsqrt.pop %v354
    %v390 = vmul.f32 %v389, %v354
    %v391 = vmul.f32 %v390, %v389
    %v392 = vmul.f32 0.5, %v391
    %v393 = vsub.f32 1.5, %v392
    %v394 = vmul.f32 %v389, %v393
    %vm395 = vweird.f32 %v354
    %vm396 = vweird.f32 %v389
    %vm397 = vmor %vm395, %vm396
    %v398 = vsel %vm397, %v389, %v394
    %v399 = vrsqrt.pop %v355
    %v400 = vmul.f32 %v399, %v355
    %v401 = vmul.f32 %v400, %v399
    %v402 = vmul.f32 0.5, %v401
    %v403 = vsub.f32 1.5, %v402
    %v404 = vmul.f32 %v399, %v403
    %vm405 = vweird.f32 %v355
    %vm406 = vweird.f32 %v399
    %vm407 = vmor %vm405, %vm406
    %v408 = vsel %vm407, %v399, %v404
    %v409 = vrsqrt.pop %v356
    %v410 = vmul.f32 %v409, %v356
    %v411 = vmul.f32 %v410, %v409
    %v412 = vmul.f32 0.5, %v411
    %v413 = vsub.f32 1.5, %v412
    %v414 = vmul.f32 %v409, %v413
    %vm415 = vweird.f32 %v356
    %vm416 = vweird.f32 %v409
    %vm417 = vmor %vm415, %vm416
    %v418 = vsel %vm417, %v409, %v414
    %v419 = vrsqrt.pop %v357
    %v420 = vmul.f32 %v419, %v357
    %v421 = vmul.f32 %v420, %v419
    %v422 = vmul.f32 0.5, %v421
    %v423 = vsub.f32 1.5, %v422
    %v424 = vmul.f32 %v419, %v423
    %vm425 = vweird.f32 %v357
    %vm426 = vweird.f32 %v419
    %vm427 = vmor %vm425, %vm426
    %v428 = vsel %vm427, %v419, %v424
    %v429 = vrsqrt.pop %v358
    %v430 = vmul.f32 %v429, %v358
    %v431 = vmul.f32 %v430, %v429
    %v432 = vmul.f32 0.5, %v431
    %v433 = vsub.f32 1.5, %v432
    %v434 = vmul.f32 %v429, %v433
    %vm435 = vweird.f32 %v358
    %vm436 = vweird.f32 %v429
    %vm437 = vmor %vm435, %vm436
    %v438 = vsel %vm437, %v429, %v434
    %v439 = vmul.f32 %v78, %v368
    %v440 = vmul.f32 %v79, %v378
    %v441 = vmul.f32 %v80, %v388
    %v442 = vmul.f32 %v81, %v398
    %v443 = vmul.f32 %v82, %v408
    %v444 = vmul.f32 %v83, %v418
    %v445 = vmul.f32 %v84, %v428
    %v446 = vmul.f32 %v85, %v438
    %v447 = vmul.f32 %v311, %v439
    %v448 = vmul.f32 %v312, %v440
    %v449 = vmul.f32 %v313, %v441
    %v450 = vmul.f32 %v314, %v442
    %v451 = vmul.f32 %v315, %v443
    %v452 = vmul.f32 %v316, %v444
    %v453 = vmul.f32 %v317, %v445
    %v454 = vmul.f32 %v318, %v446
    %463 = vrot.lane.b32.xlu0 %v447, 1
    %v464 = vpop.permute.xlu0 %463
    %465 = vrot.lane.b32.xlu0 %v448, 1
    %v466 = vpop.permute.xlu0 %465
    %467 = vrot.lane.b32.xlu0 %v449, 1
    %v468 = vpop.permute.xlu0 %467
    %469 = vrot.lane.b32.xlu0 %v450, 1
    %v470 = vpop.permute.xlu0 %469
    %471 = vrot.lane.b32.xlu0 %v451, 1
    %v472 = vpop.permute.xlu0 %471
    %473 = vrot.lane.b32.xlu0 %v452, 1
    %v474 = vpop.permute.xlu0 %473
    %475 = vrot.lane.b32.xlu0 %v453, 1
    %v476 = vpop.permute.xlu0 %475
    %477 = vrot.lane.b32.xlu0 %v454, 1
    %v478 = vpop.permute.xlu0 %477
    %v487 = vsub.f32 %v78, %v464
    %v488 = vsub.f32 %v79, %v466
    %v489 = vsub.f32 %v80, %v468
    %v490 = vsub.f32 %v81, %v470
    %v491 = vsub.f32 %v82, %v472
    %v492 = vsub.f32 %v83, %v474
    %v493 = vsub.f32 %v84, %v476
    %v494 = vsub.f32 %v85, %v478
    %496 = vset.pattern.permute.xlu0 5
    %497 = vperm.xlu0 %496, %v439
    %v498 = vpop.permute.xlu0 %497
    %501 = vset.pattern.permute.xlu0 5
    %502 = vperm.xlu0 %501, %v440
    %v503 = vpop.permute.xlu0 %502
    %506 = vset.pattern.permute.xlu0 5
    %507 = vperm.xlu0 %506, %v441
    %v508 = vpop.permute.xlu0 %507
    %511 = vset.pattern.permute.xlu0 5
    %512 = vperm.xlu0 %511, %v442
    %v513 = vpop.permute.xlu0 %512
    %516 = vset.pattern.permute.xlu0 5
    %517 = vperm.xlu0 %516, %v443
    %v518 = vpop.permute.xlu0 %517
    %521 = vset.pattern.permute.xlu0 5
    %522 = vperm.xlu0 %521, %v444
    %v523 = vpop.permute.xlu0 %522
    %526 = vset.pattern.permute.xlu0 5
    %527 = vperm.xlu0 %526, %v445
    %v528 = vpop.permute.xlu0 %527
    %531 = vset.pattern.permute.xlu0 5
    %532 = vperm.xlu0 %531, %v446
    %v533 = vpop.permute.xlu0 %532
    %v535 = vmul.f32 %v248, %v498
    %v536 = vmul.f32 %v251, %v503
    %v537 = vmul.f32 %v254, %v508
    %v538 = vmul.f32 %v257, %v513
    %v539 = vmul.f32 %v260, %v518
    %v540 = vmul.f32 %v263, %v523
    %v541 = vmul.f32 %v266, %v528
    %v542 = vmul.f32 %v269, %v533
    %544 = vset.pattern.permute.xlu0 6
    %545 = vperm.xlu0 %544, %v487
    %v546 = vpop.permute.xlu0 %545
    %549 = vset.pattern.permute.xlu0 6
    %550 = vperm.xlu0 %549, %v488
    %v551 = vpop.permute.xlu0 %550
    %554 = vset.pattern.permute.xlu0 6
    %555 = vperm.xlu0 %554, %v489
    %v556 = vpop.permute.xlu0 %555
    %559 = vset.pattern.permute.xlu0 6
    %560 = vperm.xlu0 %559, %v490
    %v561 = vpop.permute.xlu0 %560
    %564 = vset.pattern.permute.xlu0 6
    %565 = vperm.xlu0 %564, %v491
    %v566 = vpop.permute.xlu0 %565
    %569 = vset.pattern.permute.xlu0 6
    %570 = vperm.xlu0 %569, %v492
    %v571 = vpop.permute.xlu0 %570
    %574 = vset.pattern.permute.xlu0 6
    %575 = vperm.xlu0 %574, %v493
    %v576 = vpop.permute.xlu0 %575
    %579 = vset.pattern.permute.xlu0 6
    %580 = vperm.xlu0 %579, %v494
    %v581 = vpop.permute.xlu0 %580
    %v583 = vadd.f32 %v535, %v546
    %v584 = vadd.f32 %v536, %v551
    %v585 = vadd.f32 %v537, %v556
    %v586 = vadd.f32 %v538, %v561
    %v587 = vadd.f32 %v539, %v566
    %v588 = vadd.f32 %v540, %v571
    %v589 = vadd.f32 %v541, %v576
    %v590 = vadd.f32 %v542, %v581
    %v591 = vmax.f32 %v583, 0.0
    %v592 = vmax.f32 %v584, 0.0
    %v593 = vmax.f32 %v585, 0.0
    %v594 = vmax.f32 %v586, 0.0
    %v595 = vmax.f32 %v587, 0.0
    %v596 = vmax.f32 %v588, 0.0
    %v597 = vmax.f32 %v589, 0.0
    %v598 = vmax.f32 %v590, 0.0
    %s599 = scalar_lea.vmem [#allocation5], 64
    %v600 = vld [vmem:[%s599] sm:$0xff]
    %v601 = vld [vmem:[%s599 + $0x8] sm:$0xff]
    %v602 = vld [vmem:[%s599 + $0x10] sm:$0xff]
    %v603 = vld [vmem:[%s599 + $0x18] sm:$0xff]
    %v604 = vld [vmem:[%s599 + $0x20] sm:$0xff]
    %v605 = vld [vmem:[%s599 + $0x28] sm:$0xff]
    %v606 = vld [vmem:[%s599 + $0x30] sm:$0xff]
    %v607 = vld [vmem:[%s599 + $0x38] sm:$0xff]
    %v609 = vsel %vm205, %v600, 0
    %v612 = vsel %vm205, %v601, 0
    %v615 = vsel %vm205, %v602, 0
    %v618 = vsel %vm205, %v603, 0
    %v621 = vsel %vm205, %v604, 0
    %v624 = vsel %vm205, %v605, 0
    %v627 = vsel %vm205, %v606, 0
    %v630 = vsel %vm205, %v607, 0
    %632 = vmatpush.msra.mxu0 0.0
    %633 = vmatpush.msra.mxu0 0.0
    %634 = vmatpush.msra.mxu0 0.0
    %635 = vmatpush.msra.mxu0 0.0
    %636 = vmatpush.msra.mxu0 0.0
    %637 = vmatpush.msra.mxu0 0.0
    %638 = vmatpush.msra.mxu0 0.0
    %639 = vmatpush.msra.mxu0 0.0
    %640 = vmatpush.msra.mxu0 %v598
    %641 = vmatpush.msra.mxu0 %v597
    %642 = vmatpush.msra.mxu0 %v596
    %643 = vmatpush.msra.mxu0 %v595
    %644 = vmatpush.msra.mxu0 %v594
    %645 = vmatpush.msra.mxu0 %v593
    %646 = vmatpush.msra.mxu0 %v592
    %647 = vmatpush.msra.mxu0 %v591
    %648 = vmatmul.f32.gmra.mxu0 %v609
    %v649 = vpop.f32.mrf.mxu0
    %v650 = vadd.f32 0.0, %v649
    %651 = vmatmul.f32.gmra.mxu0 %v612
    %v652 = vpop.f32.mrf.mxu0
    %v653 = vadd.f32 0.0, %v652
    %654 = vmatmul.f32.gmra.mxu0 %v615
    %v655 = vpop.f32.mrf.mxu0
    %v656 = vadd.f32 0.0, %v655
    %657 = vmatmul.f32.gmra.mxu0 %v618
    %v658 = vpop.f32.mrf.mxu0
    %v659 = vadd.f32 0.0, %v658
    %660 = vmatmul.f32.gmra.mxu0 %v621
    %v661 = vpop.f32.mrf.mxu0
    %v662 = vadd.f32 0.0, %v661
    %663 = vmatmul.f32.gmra.mxu0 %v624
    %v664 = vpop.f32.mrf.mxu0
    %v665 = vadd.f32 0.0, %v664
    %666 = vmatmul.f32.gmra.mxu0 %v627
    %v667 = vpop.f32.mrf.mxu0
    %v668 = vadd.f32 0.0, %v667
    %669 = vmatmul.f32.gmra.mxu0 %v630
    %v670 = vpop.f32.mrf.mxu0
    %v671 = vadd.f32 0.0, %v670
    %672 = vdwg.mxu0
    %673 = vadd.xlane.f32.xlu0 %v650
    %v674 = vpop.xlane.xlu0 %673
    %675 = vadd.xlane.f32.xlu0 %v653
    %v676 = vpop.xlane.xlu0 %675
    %677 = vadd.xlane.f32.xlu0 %v656
    %v678 = vpop.xlane.xlu0 %677
    %679 = vadd.xlane.f32.xlu0 %v659
    %v680 = vpop.xlane.xlu0 %679
    %681 = vadd.xlane.f32.xlu0 %v662
    %v682 = vpop.xlane.xlu0 %681
    %683 = vadd.xlane.f32.xlu0 %v665
    %v684 = vpop.xlane.xlu0 %683
    %685 = vadd.xlane.f32.xlu0 %v668
    %v686 = vpop.xlane.xlu0 %685
    %687 = vadd.xlane.f32.xlu0 %v671
    %v688 = vpop.xlane.xlu0 %687
    %v689 = vmul.f32 %v650, %v650
    %v690 = vmul.f32 %v653, %v653
    %v691 = vmul.f32 %v656, %v656
    %v692 = vmul.f32 %v659, %v659
    %v693 = vmul.f32 %v662, %v662
    %v694 = vmul.f32 %v665, %v665
    %v695 = vmul.f32 %v668, %v668
    %v696 = vmul.f32 %v671, %v671
    %697 = vadd.xlane.f32.xlu0 %v689
    %v698 = vpop.xlane.xlu0 %697
    %699 = vadd.xlane.f32.xlu0 %v690
    %v700 = vpop.xlane.xlu0 %699
    %701 = vadd.xlane.f32.xlu0 %v691
    %v702 = vpop.xlane.xlu0 %701
    %703 = vadd.xlane.f32.xlu0 %v692
    %v704 = vpop.xlane.xlu0 %703
    %705 = vadd.xlane.f32.xlu0 %v693
    %v706 = vpop.xlane.xlu0 %705
    %707 = vadd.xlane.f32.xlu0 %v694
    %v708 = vpop.xlane.xlu0 %707
    %709 = vadd.xlane.f32.xlu0 %v695
    %v710 = vpop.xlane.xlu0 %709
    %711 = vadd.xlane.f32.xlu0 %v696
    %v712 = vpop.xlane.xlu0 %711
    %v713 = vmul.f32 %v674, 0.0078125
    %v714 = vmul.f32 %v676, 0.0078125
    %v715 = vmul.f32 %v678, 0.0078125
    %v716 = vmul.f32 %v680, 0.0078125
    %v717 = vmul.f32 %v682, 0.0078125
    %v718 = vmul.f32 %v684, 0.0078125
    %v719 = vmul.f32 %v686, 0.0078125
    %v720 = vmul.f32 %v688, 0.0078125
    %v721 = vmul.f32 %v698, 0.0078125
    %v722 = vmul.f32 %v700, 0.0078125
    %v723 = vmul.f32 %v702, 0.0078125
    %v724 = vmul.f32 %v704, 0.0078125
    %v725 = vmul.f32 %v706, 0.0078125
    %v726 = vmul.f32 %v708, 0.0078125
    %v727 = vmul.f32 %v710, 0.0078125
    %v728 = vmul.f32 %v712, 0.0078125
    %v729 = vmul.f32 %v713, %v713
    %v730 = vmul.f32 %v714, %v714
    %v731 = vmul.f32 %v715, %v715
    %v732 = vmul.f32 %v716, %v716
    %v733 = vmul.f32 %v717, %v717
    %v734 = vmul.f32 %v718, %v718
    %v735 = vmul.f32 %v719, %v719
    %v736 = vmul.f32 %v720, %v720
    %v737 = vsub.f32 %v721, %v729
    %v738 = vsub.f32 %v722, %v730
    %v739 = vsub.f32 %v723, %v731
    %v740 = vsub.f32 %v724, %v732
    %v741 = vsub.f32 %v725, %v733
    %v742 = vsub.f32 %v726, %v734
    %v743 = vsub.f32 %v727, %v735
    %v744 = vsub.f32 %v728, %v736
    %v745 = vmax.f32 %v737, 0.0
    %v746 = vmax.f32 %v738, 0.0
    %v747 = vmax.f32 %v739, 0.0
    %v748 = vmax.f32 %v740, 0.0
    %v749 = vmax.f32 %v741, 0.0
    %v750 = vmax.f32 %v742, 0.0
    %v751 = vmax.f32 %v743, 0.0
    %v752 = vmax.f32 %v744, 0.0
    %v753 = vadd.f32 %v745, 1e-05
    %v754 = vadd.f32 %v746, 1e-05
    %v755 = vadd.f32 %v747, 1e-05
    %v756 = vadd.f32 %v748, 1e-05
    %v757 = vadd.f32 %v749, 1e-05
    %v758 = vadd.f32 %v750, 1e-05
    %v759 = vadd.f32 %v751, 1e-05
    %v760 = vadd.f32 %v752, 1e-05
    %v761 = vrsqrt.pop %v753
    %v762 = vmul.f32 %v761, %v753
    %v763 = vmul.f32 %v762, %v761
    %v764 = vmul.f32 0.5, %v763
    %v765 = vsub.f32 1.5, %v764
    %v766 = vmul.f32 %v761, %v765
    %vm767 = vweird.f32 %v753
    %vm768 = vweird.f32 %v761
    %vm769 = vmor %vm767, %vm768
    %v770 = vsel %vm769, %v761, %v766
    %v771 = vrsqrt.pop %v754
    %v772 = vmul.f32 %v771, %v754
    %v773 = vmul.f32 %v772, %v771
    %v774 = vmul.f32 0.5, %v773
    %v775 = vsub.f32 1.5, %v774
    %v776 = vmul.f32 %v771, %v775
    %vm777 = vweird.f32 %v754
    %vm778 = vweird.f32 %v771
    %vm779 = vmor %vm777, %vm778
    %v780 = vsel %vm779, %v771, %v776
    %v781 = vrsqrt.pop %v755
    %v782 = vmul.f32 %v781, %v755
    %v783 = vmul.f32 %v782, %v781
    %v784 = vmul.f32 0.5, %v783
    %v785 = vsub.f32 1.5, %v784
    %v786 = vmul.f32 %v781, %v785
    %vm787 = vweird.f32 %v755
    %vm788 = vweird.f32 %v781
    %vm789 = vmor %vm787, %vm788
    %v790 = vsel %vm789, %v781, %v786
    %v791 = vrsqrt.pop %v756
    %v792 = vmul.f32 %v791, %v756
    %v793 = vmul.f32 %v792, %v791
    %v794 = vmul.f32 0.5, %v793
    %v795 = vsub.f32 1.5, %v794
    %v796 = vmul.f32 %v791, %v795
    %vm797 = vweird.f32 %v756
    %vm798 = vweird.f32 %v791
    %vm799 = vmor %vm797, %vm798
    %v800 = vsel %vm799, %v791, %v796
    %v801 = vrsqrt.pop %v757
    %v802 = vmul.f32 %v801, %v757
    %v803 = vmul.f32 %v802, %v801
    %v804 = vmul.f32 0.5, %v803
    %v805 = vsub.f32 1.5, %v804
    %v806 = vmul.f32 %v801, %v805
    %vm807 = vweird.f32 %v757
    %vm808 = vweird.f32 %v801
    %vm809 = vmor %vm807, %vm808
    %v810 = vsel %vm809, %v801, %v806
    %v811 = vrsqrt.pop %v758
    %v812 = vmul.f32 %v811, %v758
    %v813 = vmul.f32 %v812, %v811
    %v814 = vmul.f32 0.5, %v813
    %v815 = vsub.f32 1.5, %v814
    %v816 = vmul.f32 %v811, %v815
    %vm817 = vweird.f32 %v758
    %vm818 = vweird.f32 %v811
    %vm819 = vmor %vm817, %vm818
    %v820 = vsel %vm819, %v811, %v816
    %v821 = vrsqrt.pop %v759
    %v822 = vmul.f32 %v821, %v759
    %v823 = vmul.f32 %v822, %v821
    %v824 = vmul.f32 0.5, %v823
    %v825 = vsub.f32 1.5, %v824
    %v826 = vmul.f32 %v821, %v825
    %vm827 = vweird.f32 %v759
    %vm828 = vweird.f32 %v821
    %vm829 = vmor %vm827, %vm828
    %v830 = vsel %vm829, %v821, %v826
    %v831 = vrsqrt.pop %v760
    %v832 = vmul.f32 %v831, %v760
    %v833 = vmul.f32 %v832, %v831
    %v834 = vmul.f32 0.5, %v833
    %v835 = vsub.f32 1.5, %v834
    %v836 = vmul.f32 %v831, %v835
    %vm837 = vweird.f32 %v760
    %vm838 = vweird.f32 %v831
    %vm839 = vmor %vm837, %vm838
    %v840 = vsel %vm839, %v831, %v836
    %v841 = vmul.f32 %v78, %v770
    %v842 = vmul.f32 %v79, %v780
    %v843 = vmul.f32 %v80, %v790
    %v844 = vmul.f32 %v81, %v800
    %v845 = vmul.f32 %v82, %v810
    %v846 = vmul.f32 %v83, %v820
    %v847 = vmul.f32 %v84, %v830
    %v848 = vmul.f32 %v85, %v840
    %v849 = vmul.f32 %v713, %v841
    %v850 = vmul.f32 %v714, %v842
    %v851 = vmul.f32 %v715, %v843
    %v852 = vmul.f32 %v716, %v844
    %v853 = vmul.f32 %v717, %v845
    %v854 = vmul.f32 %v718, %v846
    %v855 = vmul.f32 %v719, %v847
    %v856 = vmul.f32 %v720, %v848
    %865 = vrot.lane.b32.xlu0 %v849, 1
    %v866 = vpop.permute.xlu0 %865
    %867 = vrot.lane.b32.xlu0 %v850, 1
    %v868 = vpop.permute.xlu0 %867
    %869 = vrot.lane.b32.xlu0 %v851, 1
    %v870 = vpop.permute.xlu0 %869
    %871 = vrot.lane.b32.xlu0 %v852, 1
    %v872 = vpop.permute.xlu0 %871
    %873 = vrot.lane.b32.xlu0 %v853, 1
    %v874 = vpop.permute.xlu0 %873
    %875 = vrot.lane.b32.xlu0 %v854, 1
    %v876 = vpop.permute.xlu0 %875
    %877 = vrot.lane.b32.xlu0 %v855, 1
    %v878 = vpop.permute.xlu0 %877
    %879 = vrot.lane.b32.xlu0 %v856, 1
    %v880 = vpop.permute.xlu0 %879
    %v889 = vsub.f32 %v78, %v866
    %v890 = vsub.f32 %v79, %v868
    %v891 = vsub.f32 %v80, %v870
    %v892 = vsub.f32 %v81, %v872
    %v893 = vsub.f32 %v82, %v874
    %v894 = vsub.f32 %v83, %v876
    %v895 = vsub.f32 %v84, %v878
    %v896 = vsub.f32 %v85, %v880
    %898 = vset.pattern.permute.xlu0 7
    %899 = vperm.xlu0 %898, %v841
    %v900 = vpop.permute.xlu0 %899
    %903 = vset.pattern.permute.xlu0 7
    %904 = vperm.xlu0 %903, %v842
    %v905 = vpop.permute.xlu0 %904
    %908 = vset.pattern.permute.xlu0 7
    %909 = vperm.xlu0 %908, %v843
    %v910 = vpop.permute.xlu0 %909
    %913 = vset.pattern.permute.xlu0 7
    %914 = vperm.xlu0 %913, %v844
    %v915 = vpop.permute.xlu0 %914
    %918 = vset.pattern.permute.xlu0 7
    %919 = vperm.xlu0 %918, %v845
    %v920 = vpop.permute.xlu0 %919
    %923 = vset.pattern.permute.xlu0 7
    %924 = vperm.xlu0 %923, %v846
    %v925 = vpop.permute.xlu0 %924
    %928 = vset.pattern.permute.xlu0 7
    %929 = vperm.xlu0 %928, %v847
    %v930 = vpop.permute.xlu0 %929
    %933 = vset.pattern.permute.xlu0 7
    %934 = vperm.xlu0 %933, %v848
    %v935 = vpop.permute.xlu0 %934
    %v937 = vmul.f32 %v650, %v900
    %v938 = vmul.f32 %v653, %v905
    %v939 = vmul.f32 %v656, %v910
    %v940 = vmul.f32 %v659, %v915
    %v941 = vmul.f32 %v662, %v920
    %v942 = vmul.f32 %v665, %v925
    %v943 = vmul.f32 %v668, %v930
    %v944 = vmul.f32 %v671, %v935
    %946 = vset.pattern.permute.xlu0 8
    %947 = vperm.xlu0 %946, %v889
    %v948 = vpop.permute.xlu0 %947
    %951 = vset.pattern.permute.xlu0 8
    %952 = vperm.xlu0 %951, %v890
    %v953 = vpop.permute.xlu0 %952
    %956 = vset.pattern.permute.xlu0 8
    %957 = vperm.xlu0 %956, %v891
    %v958 = vpop.permute.xlu0 %957
    %961 = vset.pattern.permute.xlu0 8
    %962 = vperm.xlu0 %961, %v892
    %v963 = vpop.permute.xlu0 %962
    %966 = vset.pattern.permute.xlu0 8
    %967 = vperm.xlu0 %966, %v893
    %v968 = vpop.permute.xlu0 %967
    %971 = vset.pattern.permute.xlu0 8
    %972 = vperm.xlu0 %971, %v894
    %v973 = vpop.permute.xlu0 %972
    %976 = vset.pattern.permute.xlu0 8
    %977 = vperm.xlu0 %976, %v895
    %v978 = vpop.permute.xlu0 %977
    %981 = vset.pattern.permute.xlu0 8
    %982 = vperm.xlu0 %981, %v896
    %v983 = vpop.permute.xlu0 %982
    %v985 = vadd.f32 %v937, %v948
    %v986 = vadd.f32 %v938, %v953
    %v987 = vadd.f32 %v939, %v958
    %v988 = vadd.f32 %v940, %v963
    %v989 = vadd.f32 %v941, %v968
    %v990 = vadd.f32 %v942, %v973
    %v991 = vadd.f32 %v943, %v978
    %v992 = vadd.f32 %v944, %v983
    %v993 = vmax.f32 %v985, 0.0
    %v994 = vmax.f32 %v986, 0.0
    %v995 = vmax.f32 %v987, 0.0
    %v996 = vmax.f32 %v988, 0.0
    %v997 = vmax.f32 %v989, 0.0
    %v998 = vmax.f32 %v990, 0.0
    %v999 = vmax.f32 %v991, 0.0
    %v1000 = vmax.f32 %v992, 0.0
    %1002 = vset.pattern.permute.xlu0 64
    %1003 = vperm.xlu0 %1002, %v86
    %v1004 = vpop.permute.xlu0 %1003
    %v1006 = vsel %vm205, %v86, 0
    %1008 = vmatpush.msra.mxu0 0.0
    %1009 = vmatpush.msra.mxu0 0.0
    %1010 = vmatpush.msra.mxu0 0.0
    %1011 = vmatpush.msra.mxu0 0.0
    %1012 = vmatpush.msra.mxu0 0.0
    %1013 = vmatpush.msra.mxu0 0.0
    %1014 = vmatpush.msra.mxu0 0.0
    %1015 = vmatpush.msra.mxu0 0.0
    %1016 = vmatpush.msra.mxu0 %v1000
    %1017 = vmatpush.msra.mxu0 %v999
    %1018 = vmatpush.msra.mxu0 %v998
    %1019 = vmatpush.msra.mxu0 %v997
    %1020 = vmatpush.msra.mxu0 %v996
    %1021 = vmatpush.msra.mxu0 %v995
    %1022 = vmatpush.msra.mxu0 %v994
    %1023 = vmatpush.msra.mxu0 %v993
    %1024 = vmatmul.f32.gmra.mxu0 %v1006
    %v1025 = vpop.f32.mrf.mxu0
    %v1026 = vadd.f32 %v1004, %v1025
    %1027 = vdwg.mxu0
    %1028 = vst [vmem:[#allocation10] sm:$0xf] %v1026
    // Predicated region
    $region34: #{tpu_custom_call.1} parent=1 // pred_check
      _
    $region35: #{tpu_custom_call.1} parent=1 // pred_check_branch
      %1030 = sbr.rel (0) target = $region37
    $region36: #{tpu_custom_call.1} parent=1 // pred_region
      %1032 = vsyncadd [#allocation4], 0
      %s1034 = sshll.u32 [#allocation10], 4
      %s1035 = int_to_ptr.vmem [resolvable:$true] %s1034
      %s1036 = sshll.u32 %s4, 4
      %s1037 = int_to_ptr.hbm [resolvable:$true] %s1036
      %1039 = dma.vmem_to_hbm [thread:$0]  %s1035, 64, %s1037, [#allocation4]
    $region37: #{tpu_custom_call.1} parent=1 // pred_fallthru
      _
    // Predicated region
    $region38: #{tpu_custom_call.1} parent=1 // pred_check
      _
    $region39: #{tpu_custom_call.1} parent=1 // pred_check_branch
      %1041 = sbr.rel (0) target = $region41
    $region40: #{tpu_custom_call.1} parent=1 // pred_region
      %1043 = dma.done [#allocation4], 64
    $region41: #{tpu_custom_call.1} parent=1 // pred_fallthru
      _
    %1044 = vsyncpa [#allocation3], 1
    %1045 = vsyncpa [#allocation6], 1
    %1046 = vsyncpa [#allocation9], 1
    %1047 = vsyncpa [#allocation4], 1

</llo_original>
